<compile_context>
chip_gen: v6e
topology: v6e:2x2x1
jax: 0.10.0
libtpu: 0.0.40
codegen_flags: <defaults>
</compile_context>

<pallas_src>
import jax
import jax.numpy as jnp
from jax.experimental import pallas as pl
from jax.experimental.pallas import tpu as pltpu

EPS = 1e-6


def _layernorm_f32(x, a2, b2):
    """Single-pass LayerNorm stats (torch semantics: unbiased std, eps on std)."""
    h = x.shape[-1]
    s1 = jnp.sum(x, axis=-1, keepdims=True)
    s2 = jnp.sum(x * x, axis=-1, keepdims=True)
    mean = s1 * (1.0 / h)
    var = jnp.maximum((s2 - s1 * mean) * (1.0 / (h - 1)), 0.0)   # unbiased
    inv = pl.reciprocal(jnp.sqrt(var) + EPS, approx=True)        # EUP slot
    return a2 * (x - mean) * inv + b2


def _resident_kernel(x_ref, params_ref, w_ref, o_ref):
    # x_ref:      (TR, H)  input rows
    # params_ref: (3, H)   rows = [a_2 (gamma), b_2 (beta), sublayer bias]
    # w_ref:      (H, H)   bf16 weight, VMEM-resident (constant index_map)
    # o_ref:      (TR, H)  output rows
    x = x_ref[...].astype(jnp.float32)
    params = params_ref[...]
    a2, b2, bias = params[0:1, :], params[1:2, :], params[2:3, :]
    normed = _layernorm_f32(x, a2, b2).astype(w_ref.dtype)       # bf16 for MXU
    sub = jnp.dot(normed, w_ref[...], preferred_element_type=jnp.float32)
    # dropout (eval mode = identity) + residual
    o_ref[...] = (x + sub + bias).astype(o_ref.dtype)


def _tiled_kernel(x_ref, xcols_ref, ab_ref, bias_ref, w_ref, o_ref):
    # Fallback when the full (H, H) weight does not fit VMEM.
    # x_ref:     (TR, H)   full rows (for LayerNorm), constant over j
    # xcols_ref: (TR, TN)  residual column tile (BlockSpec-delivered)
    # ab_ref:    (2, H)    [gamma, beta]
    # bias_ref:  (1, TN)   sublayer bias column tile
    # w_ref:     (H, TN)   bf16 weight column tile
    # o_ref:     (TR, TN)  output column tile
    x = x_ref[...].astype(jnp.float32)
    ab = ab_ref[...]
    normed = _layernorm_f32(x, ab[0:1, :], ab[1:2, :]).astype(w_ref.dtype)
    sub = jnp.dot(normed, w_ref[...], preferred_element_type=jnp.float32)
    o_ref[...] = (xcols_ref[...].astype(jnp.float32) + sub
                  + bias_ref[...]).astype(o_ref.dtype)


def _round_up(n, m):
    return ((n + m - 1) // m) * m


def _vmem_capacity_bytes():
    try:
        return int(pltpu.get_tpu_info().vmem_capacity_bytes)
    except Exception:
        return 64 * 1024 * 1024          # conservative: v7x per-TC VMEM


def sublayer_connection(x, a2, b2, w, bw, *, row_tile=256):
    """out = x + (LayerNorm(x) @ w + bw)   (pre-norm residual, eval dropout).

    x: (B, S, H) float32; a2/b2/bw: (H,); w: (H, H). Returns (B, S, H).
    """
    B, S, H = x.shape
    assert H % 128 == 0, "hidden size must be a multiple of 128 (TPU lane width)"
    R = B * S
    x2d = x.reshape(R, H)

    # Pad rows to a multiple of >=128 so the MXU M-dim is well utilized and
    # arbitrary B*S is handled.  Padded rows are junk and sliced off below.
    tr = min(row_tile, _round_up(R, 128))
    R_pad = _round_up(R, tr)
    if R_pad != R:
        x2d = jnp.pad(x2d, ((0, R_pad - R), (0, 0)))

    # bf16 weight: half the HBM/VMEM bytes, native MXU rate (f32 accumulate).
    w_bf16 = w.astype(jnp.bfloat16)

    usable = int(_vmem_capacity_bytes() * 0.85)

    # ---- Path A: full (H, H) weight resident in VMEM (DMA'd exactly once). ----
    need_resident = (2 * H * H * 2            # weight (counted double-buffered)
                     + 4 * tr * H * 4         # x + out, double-buffered
                     + 2 * 3 * H * 4)         # packed params
    if need_resident <= usable:
        params = jnp.stack([a2, b2, bw], axis=0).astype(jnp.float32)   # (3, H)
        out = pl.pallas_call(
            _resident_kernel,
            out_shape=jax.ShapeDtypeStruct((R_pad, H), x.dtype),
            grid_spec=pltpu.PrefetchScalarGridSpec(
                num_scalar_prefetch=0,
                grid=(R_pad // tr,),
                in_specs=[
                    pl.BlockSpec((tr, H), lambda i: (i, 0)),   # x rows
                    pl.BlockSpec((3, H), lambda i: (0, 0)),    # gamma/beta/bias
                    pl.BlockSpec((H, H), lambda i: (0, 0)),    # resident weight
                ],
                out_specs=pl.BlockSpec((tr, H), lambda i: (i, 0)),
            ),
            compiler_params=pltpu.CompilerParams(
                dimension_semantics=("parallel",),
                vmem_limit_bytes=min(usable, need_resident + (16 << 20)),
            ),
        )(x2d, params, w_bf16)
        return out[:R].reshape(B, S, H)

    # ---- Path B: column-tiled weight (H too large for residency). ----
    # LayerNorm recomputed per step (cheap vs the matmul); residual / bias /
    # weight column tiles are BlockSpec-delivered -> no dynamic lane slices.
    # TODO(synk): pipeline_mode=pl.Buffered(3) on the weight stream where the
    # VMEM budget allows (v5e/v6e) to hide exposed DMA latency.
    tn = None
    for cand in (2048, 1024, 512, 256, 128):
        if H % cand:
            continue
        need = (2 * tr * H * 4        # x full rows
                + 2 * tr * cand * 4   # x column tile
                + 2 * H * cand * 2    # weight column tile
                + 2 * 2 * H * 4       # gamma/beta
                + 2 * cand * 4        # bias column tile
                + 2 * tr * cand * 4)  # out column tile
        if need <= usable:
            tn = cand
            break
    if tn is None:
        raise ValueError(f"hidden size {H} too large for available VMEM tiling")

    ab = jnp.stack([a2, b2], axis=0).astype(jnp.float32)      # (2, H)
    bias2d = bw.reshape(1, H).astype(jnp.float32)             # (1, H)
    out = pl.pallas_call(
        _tiled_kernel,
        out_shape=jax.ShapeDtypeStruct((R_pad, H), x.dtype),
        grid_spec=pltpu.PrefetchScalarGridSpec(
            num_scalar_prefetch=0,
            grid=(R_pad // tr, H // tn),
            in_specs=[
                pl.BlockSpec((tr, H), lambda i, j: (i, 0)),    # rows for LN
                pl.BlockSpec((tr, tn), lambda i, j: (i, j)),   # residual cols
                pl.BlockSpec((2, H), lambda i, j: (0, 0)),     # gamma/beta
                pl.BlockSpec((1, tn), lambda i, j: (0, j)),    # bias cols
                pl.BlockSpec((H, tn), lambda i, j: (0, j)),    # weight cols
            ],
            out_specs=pl.BlockSpec((tr, tn), lambda i, j: (i, j)),
        ),
        compiler_params=pltpu.CompilerParams(
            dimension_semantics=("parallel", "arbitrary"),
            vmem_limit_bytes=usable,
        ),
    )(x2d, x2d, ab, bias2d, w_bf16)
    return out[:R].reshape(B, S, H)


def _reference(x, a2, b2, w, bw):
    # Pure-JAX reference mirroring the PyTorch code (unbiased std, eps on std).
    mean = jnp.mean(x, axis=-1, keepdims=True)
    std = jnp.std(x, axis=-1, keepdims=True, ddof=1)
    normed = a2 * (x - mean) / (std + EPS) + b2
    return x + (normed @ w + bw)


if __name__ == "__main__":
    key = jax.random.PRNGKey(0)
    B, S, H = 2, 8, 128

    kx, kw, kb = jax.random.split(key, 3)
    x = jax.random.normal(kx, (B, S, H), dtype=jnp.float32)

    # LayerNorm parameters per the module's __init__: ones / zeros.
    a2 = jnp.ones((H,), dtype=jnp.float32)
    b2 = jnp.zeros((H,), dtype=jnp.float32)

    # Deterministic synthetic sublayer (dense) parameters.
    w = jax.random.normal(kw, (H, H), dtype=jnp.float32) * (1.0 / jnp.sqrt(H))
    bw = jax.random.normal(kb, (H,), dtype=jnp.float32) * 0.01

    out = sublayer_connection(x, a2, b2, w, bw)
    out = jax.block_until_ready(out)

    ref = _reference(x, a2, b2, w, bw)
    assert out.shape == (B, S, H)
    # Tolerance reflects the bf16 MXU matmul (f32 accumulate) and the
    # approximate EUP reciprocal; LN semantics themselves are exact.
    assert jnp.allclose(out, ref, atol=3e-2, rtol=3e-2), "mismatch vs reference"

    print("KERNEL_OK")
</pallas_src>

<mosaic_0001>
module attributes {stable_mosaic.version = 11 : i64} {
  func.func @_resident_kernel(%arg0: i32, %arg1: memref<128x128xf32, #tpu.memory_space<vmem>>, %arg2: memref<3x128xf32, #tpu.memory_space<vmem>>, %arg3: memref<128x128xbf16, #tpu.memory_space<vmem>>, %arg4: memref<128x128xf32, #tpu.memory_space<vmem>>) attributes {dimension_semantics = [#tpu.dimension_semantics<parallel>], iteration_bounds = array<i64: 1>, scalar_prefetch = 0 : i64, scratch_operands = 0 : i64, tpu.core_type = #tpu.core_type<tc>, window_params = [{transform_indices = @transform_0, window_bounds = array<i64: 128, 128>}, {pipeline_mode = #tpu.pipeline_mode<synchronous>, transform_indices = @transform_1, window_bounds = array<i64: 3, 128>}, {pipeline_mode = #tpu.pipeline_mode<synchronous>, transform_indices = @transform_2, window_bounds = array<i64: 128, 128>}, {transform_indices = @transform_3, window_bounds = array<i64: 128, 128>}]} {
    %c0 = arith.constant 0 : index
    %c0_0 = arith.constant 0 : index
    %0 = vector.load %arg1[%c0, %c0_0] : memref<128x128xf32, #tpu.memory_space<vmem>>, vector<128x128xf32>
    %c0_1 = arith.constant 0 : index
    %c0_2 = arith.constant 0 : index
    %1 = vector.load %arg2[%c0_1, %c0_2] : memref<3x128xf32, #tpu.memory_space<vmem>>, vector<3x128xf32>
    %2 = vector.extract_strided_slice %1 {offsets = [0, 0], sizes = [1, 128], strides = [1, 1]} : vector<3x128xf32> to vector<1x128xf32>
    %3 = vector.extract_strided_slice %1 {offsets = [1, 0], sizes = [1, 128], strides = [1, 1]} : vector<3x128xf32> to vector<1x128xf32>
    %4 = vector.extract_strided_slice %1 {offsets = [2, 0], sizes = [1, 128], strides = [1, 1]} : vector<3x128xf32> to vector<1x128xf32>
    %cst = arith.constant dense<0.000000e+00> : vector<128xf32>
    %5 = vector.multi_reduction <add>, %0, %cst [1] : vector<128x128xf32> to vector<128xf32>
    %6 = vector.shape_cast %5 : vector<128xf32> to vector<128x1xf32>
    %7 = arith.mulf %0, %0 : vector<128x128xf32>
    %cst_3 = arith.constant dense<0.000000e+00> : vector<128xf32>
    %8 = vector.multi_reduction <add>, %7, %cst_3 [1] : vector<128x128xf32> to vector<128xf32>
    %9 = vector.shape_cast %8 : vector<128xf32> to vector<128x1xf32>
    %cst_4 = arith.constant 7.812500e-03 : f32
    %10 = vector.broadcast %cst_4 : f32 to vector<128x1xf32>
    %11 = arith.mulf %6, %10 : vector<128x1xf32>
    %12 = arith.mulf %6, %11 : vector<128x1xf32>
    %13 = arith.subf %9, %12 : vector<128x1xf32>
    %cst_5 = arith.constant 0.00787401571 : f32
    %14 = vector.broadcast %cst_5 : f32 to vector<128x1xf32>
    %15 = arith.mulf %13, %14 : vector<128x1xf32>
    %cst_6 = arith.constant 0.000000e+00 : f32
    %16 = vector.broadcast %cst_6 : f32 to vector<128x1xf32>
    %17 = arith.maximumf %15, %16 : vector<128x1xf32>
    %18 = math.sqrt %17 : vector<128x1xf32>
    %cst_7 = arith.constant 9.99999997E-7 : f32
    %19 = vector.broadcast %cst_7 : f32 to vector<128x1xf32>
    %20 = arith.addf %18, %19 : vector<128x1xf32>
    %21 = tpu.reciprocal %20 {approx = true} : vector<128x1xf32> -> vector<128x1xf32>
    %22 = vector.broadcast %11 : vector<128x1xf32> to vector<128x128xf32>
    %23 = arith.subf %0, %22 : vector<128x128xf32>
    %24 = vector.broadcast %2 : vector<1x128xf32> to vector<128x128xf32>
    %25 = arith.mulf %24, %23 : vector<128x128xf32>
    %26 = vector.broadcast %21 : vector<128x1xf32> to vector<128x128xf32>
    %27 = arith.mulf %25, %26 : vector<128x128xf32>
    %28 = vector.broadcast %3 : vector<1x128xf32> to vector<128x128xf32>
    %29 = arith.addf %27, %28 : vector<128x128xf32>
    %30 = arith.truncf %29 : vector<128x128xf32> to vector<128x128xbf16>
    %c0_8 = arith.constant 0 : index
    %c0_9 = arith.constant 0 : index
    %31 = vector.load %arg3[%c0_8, %c0_9] : memref<128x128xbf16, #tpu.memory_space<vmem>>, vector<128x128xbf16>
    %cst_10 = arith.constant dense<0.000000e+00> : vector<128x128xf32>
    %32 = tpu.matmul %30, %31, %cst_10 {dimension_numbers = #tpu.dot_dimension_numbers<[1], [0], [0], [1], [0, 0, 1, 1], [], []>} : vector<128x128xbf16>, vector<128x128xbf16>, vector<128x128xf32> -> vector<128x128xf32>
    %33 = arith.addf %0, %32 : vector<128x128xf32>
    %34 = vector.broadcast %4 : vector<1x128xf32> to vector<128x128xf32>
    %35 = arith.addf %33, %34 : vector<128x128xf32>
    %c0_11 = arith.constant 0 : index
    %c0_12 = arith.constant 0 : index
    %36 = vector.load %arg4[%c0_11, %c0_12] : memref<128x128xf32, #tpu.memory_space<vmem>>, vector<128x128xf32>
    tpu.vector_store %arg4[%c0_11, %c0_12], %35 {strides = array<i32>} : memref<128x128xf32, #tpu.memory_space<vmem>>, vector<128x128xf32>,
    return
  }
  func.func @transform_0(%arg0: i32) -> (i32, i32) {
    %c0_i32 = arith.constant 0 : i32
    %c0_i32_0 = arith.constant 0 : i32
    return %arg0, %c0_i32 : i32, i32
  }
  func.func @transform_1(%arg0: i32) -> (i32, i32) {
    %c0_i32 = arith.constant 0 : i32
    %c0_i32_0 = arith.constant 0 : i32
    %c0_i32_1 = arith.constant 0 : i32
    return %c0_i32, %c0_i32_0 : i32, i32
  }
  func.func @transform_2(%arg0: i32) -> (i32, i32) {
    %c0_i32 = arith.constant 0 : i32
    %c0_i32_0 = arith.constant 0 : i32
    %c0_i32_1 = arith.constant 0 : i32
    return %c0_i32, %c0_i32_0 : i32, i32
  }
  func.func @transform_3(%arg0: i32) -> (i32, i32) {
    %c0_i32 = arith.constant 0 : i32
    %c0_i32_0 = arith.constant 0 : i32
    return %arg0, %c0_i32 : i32, i32
  }
}

</mosaic_0001>

<llo_original>
// kernel: tpu_custom_call.1
$region0: #{tpu_custom_call.1}
  #allocation0 [shape = 'u32[]', space=smem, size = 0x4, offset = 0x4, fixed_abs, tag = 'smem constant byte address 0x4 - core index']
  #allocation1 [shape = 'u32[144,128]{1,0:T(1,128)}', space=vmem, size = 0x12000, scoped, tag = 'internal scratch']
  %s0 = inlined_call_operand.hbm [shape: f32[128,128], index: 0, kind: input, shape index: {}]
  %s1 = inlined_call_operand.hbm [shape: f32[3,128], index: 1, kind: input, shape index: {}]
  %s2 = inlined_call_operand.hbm [shape: bf16[128,128], index: 2, kind: input, shape index: {}]
  %s3 = inlined_call_operand.hbm [shape: f32[128,128], index: 3, kind: output, shape index: {}]
  %s4 = sld [smem:[#allocation0]]
  $region34: #{tpu_custom_call.1} parent=0
    _
  %s6 = ssub.s32 1, %s4
  %s7 = scalar_select 0, %s6, %s4
  $region1: #{tpu_custom_call.1} parent=0
    #allocation2 [shape = 'u8[65536]{0}', space=vmem, size = 0x10000, scoped, tag = 'input window, operand 0, single buffered']
    #allocation3 [shape = 's32[1]{0}', space=sflag, size = 0x4, scoped, tag = 'scoped memory for tpu_custom_call.1']
    #allocation4 [shape = 's32[1]{0}', space=sflag, size = 0x4, scoped, tag = 'scoped memory for tpu_custom_call.1']
    #allocation5 [shape = 'u8[2048]{0}', space=vmem, size = 0x800, scoped, tag = 'input window, operand 1, single buffered']
    #allocation6 [shape = 's32[1]{0}', space=sflag, size = 0x4, scoped, tag = 'scoped memory for tpu_custom_call.1']
    #allocation7 [shape = 'u8[32768]{0}', space=vmem, size = 0x8000, scoped, tag = 'input window, operand 2, single buffered']
    #allocation8 [shape = 'u8[65536]{0}', space=vmem, size = 0x10000, scoped, tag = 'output window, operand 0, single buffered']
    %8 = vsyncpa [#allocation3], 0
    %9 = vsyncpa [#allocation6], 0
    %10 = vsyncpa [#allocation4], 0
    // Predicated region
    $region2: #{tpu_custom_call.1} parent=1 // pred_check
      _
    $region3: #{tpu_custom_call.1} parent=1 // pred_check_branch
      %12 = sbr.rel (0) target = $region5
    $region4: #{tpu_custom_call.1} parent=1 // pred_region
      %s14 = ssub.s32 2048, 2048
      %15 = vsyncadd [#allocation3], %s14
      %s16 = sshll.u32 [#allocation2], 4
      %s17 = int_to_ptr.vmem [resolvable:$true] %s16
      %22 = dma.hbm_to_vmem [thread:$0]  %s0, 2048, %s17, [#allocation3], 128, 128, 8
    $region5: #{tpu_custom_call.1} parent=1 // pred_fallthru
      _
    // Predicated region
    $region6: #{tpu_custom_call.1} parent=1 // pred_check
      _
    $region7: #{tpu_custom_call.1} parent=1 // pred_check_branch
      %24 = sbr.rel (0) target = $region9
    $region8: #{tpu_custom_call.1} parent=1 // pred_region
      %s26 = ssub.s32 64, 64
      %27 = vsyncadd [#allocation6], %s26
      %s29 = sshll.u32 [#allocation5], 4
      %s30 = int_to_ptr.vmem [resolvable:$true] %s29
      %32 = dma.hbm_to_vmem [thread:$0]  %s1, 64, %s30, [#allocation6]
    $region9: #{tpu_custom_call.1} parent=1 // pred_fallthru
      _
    // Predicated region
    $region10: #{tpu_custom_call.1} parent=1 // pred_check
      _
    $region11: #{tpu_custom_call.1} parent=1 // pred_check_branch
      %34 = sbr.rel (0) target = $region13
    $region12: #{tpu_custom_call.1} parent=1 // pred_region
      %s36 = ssub.s32 1024, 1024
      %37 = vsyncadd [#allocation6], %s36
      %s38 = sshll.u32 [#allocation7], 4
      %s39 = int_to_ptr.vmem [resolvable:$true] %s38
      %44 = dma.hbm_to_vmem [thread:$0]  %s2, 1024, %s39, [#allocation6], 64, 64, 4
    $region13: #{tpu_custom_call.1} parent=1 // pred_fallthru
      _
    // Predicated region
    $region14: #{tpu_custom_call.1} parent=1 // pred_check
      _
    $region15: #{tpu_custom_call.1} parent=1 // pred_check_branch
      %46 = sbr.rel (0) target = $region17
    $region16: #{tpu_custom_call.1} parent=1 // pred_region
      %47 = dma.done [#allocation3], 2048
    $region17: #{tpu_custom_call.1} parent=1 // pred_fallthru
      _
    // Predicated region
    $region18: #{tpu_custom_call.1} parent=1 // pred_check
      _
    $region19: #{tpu_custom_call.1} parent=1 // pred_check_branch
      %49 = sbr.rel (0) target = $region21
    $region20: #{tpu_custom_call.1} parent=1 // pred_region
      %50 = dma.done [#allocation6], 64
    $region21: #{tpu_custom_call.1} parent=1 // pred_fallthru
      _
    // Predicated region
    $region22: #{tpu_custom_call.1} parent=1 // pred_check
      _
    $region23: #{tpu_custom_call.1} parent=1 // pred_check_branch
      %52 = sbr.rel (0) target = $region25
    $region24: #{tpu_custom_call.1} parent=1 // pred_region
      %53 = dma.done [#allocation6], 1024
    $region25: #{tpu_custom_call.1} parent=1 // pred_fallthru
      _
    %v55 = vld [vmem:[#allocation2] sm:$0xff]
    %v56 = vld [vmem:[#allocation2 + $0x8] sm:$0xff]
    %v57 = vld [vmem:[#allocation2 + $0x10] sm:$0xff]
    %v58 = vld [vmem:[#allocation2 + $0x18] sm:$0xff]
    %v59 = vld [vmem:[#allocation2 + $0x20] sm:$0xff]
    %v60 = vld [vmem:[#allocation2 + $0x28] sm:$0xff]
    %v61 = vld [vmem:[#allocation2 + $0x30] sm:$0xff]
    %v62 = vld [vmem:[#allocation2 + $0x38] sm:$0xff]
    %v63 = vld [vmem:[#allocation2 + $0x40] sm:$0xff]
    %v64 = vld [vmem:[#allocation2 + $0x48] sm:$0xff]
    %v65 = vld [vmem:[#allocation2 + $0x50] sm:$0xff]
    %v66 = vld [vmem:[#allocation2 + $0x58] sm:$0xff]
    %v67 = vld [vmem:[#allocation2 + $0x60] sm:$0xff]
    %v68 = vld [vmem:[#allocation2 + $0x68] sm:$0xff]
    %v69 = vld [vmem:[#allocation2 + $0x70] sm:$0xff]
    %v70 = vld [vmem:[#allocation2 + $0x78] sm:$0xff]
    %v71 = vld [vmem:[#allocation5] sm:$0x7]
    %72 = vadd.xlane.f32.xlu0 %v55
    %v73 = vpop.xlane.xlu0 %72
    %74 = vadd.xlane.f32.xlu0 %v56
    %v75 = vpop.xlane.xlu0 %74
    %76 = vadd.xlane.f32.xlu0 %v57
    %v77 = vpop.xlane.xlu0 %76
    %78 = vadd.xlane.f32.xlu0 %v58
    %v79 = vpop.xlane.xlu0 %78
    %80 = vadd.xlane.f32.xlu0 %v59
    %v81 = vpop.xlane.xlu0 %80
    %82 = vadd.xlane.f32.xlu0 %v60
    %v83 = vpop.xlane.xlu0 %82
    %84 = vadd.xlane.f32.xlu0 %v61
    %v85 = vpop.xlane.xlu0 %84
    %86 = vadd.xlane.f32.xlu0 %v62
    %v87 = vpop.xlane.xlu0 %86
    %88 = vadd.xlane.f32.xlu0 %v63
    %v89 = vpop.xlane.xlu0 %88
    %90 = vadd.xlane.f32.xlu0 %v64
    %v91 = vpop.xlane.xlu0 %90
    %92 = vadd.xlane.f32.xlu0 %v65
    %v93 = vpop.xlane.xlu0 %92
    %94 = vadd.xlane.f32.xlu0 %v66
    %v95 = vpop.xlane.xlu0 %94
    %96 = vadd.xlane.f32.xlu0 %v67
    %v97 = vpop.xlane.xlu0 %96
    %98 = vadd.xlane.f32.xlu0 %v68
    %v99 = vpop.xlane.xlu0 %98
    %100 = vadd.xlane.f32.xlu0 %v69
    %v101 = vpop.xlane.xlu0 %100
    %102 = vadd.xlane.f32.xlu0 %v70
    %v103 = vpop.xlane.xlu0 %102
    %v104 = vmul.f32 %v55, %v55
    %v105 = vmul.f32 %v56, %v56
    %v106 = vmul.f32 %v57, %v57
    %v107 = vmul.f32 %v58, %v58
    %v108 = vmul.f32 %v59, %v59
    %v109 = vmul.f32 %v60, %v60
    %v110 = vmul.f32 %v61, %v61
    %v111 = vmul.f32 %v62, %v62
    %v112 = vmul.f32 %v63, %v63
    %v113 = vmul.f32 %v64, %v64
    %v114 = vmul.f32 %v65, %v65
    %v115 = vmul.f32 %v66, %v66
    %v116 = vmul.f32 %v67, %v67
    %v117 = vmul.f32 %v68, %v68
    %v118 = vmul.f32 %v69, %v69
    %v119 = vmul.f32 %v70, %v70
    %120 = vadd.xlane.f32.xlu0 %v104
    %v121 = vpop.xlane.xlu0 %120
    %122 = vadd.xlane.f32.xlu0 %v105
    %v123 = vpop.xlane.xlu0 %122
    %124 = vadd.xlane.f32.xlu0 %v106
    %v125 = vpop.xlane.xlu0 %124
    %126 = vadd.xlane.f32.xlu0 %v107
    %v127 = vpop.xlane.xlu0 %126
    %128 = vadd.xlane.f32.xlu0 %v108
    %v129 = vpop.xlane.xlu0 %128
    %130 = vadd.xlane.f32.xlu0 %v109
    %v131 = vpop.xlane.xlu0 %130
    %132 = vadd.xlane.f32.xlu0 %v110
    %v133 = vpop.xlane.xlu0 %132
    %134 = vadd.xlane.f32.xlu0 %v111
    %v135 = vpop.xlane.xlu0 %134
    %136 = vadd.xlane.f32.xlu0 %v112
    %v137 = vpop.xlane.xlu0 %136
    %138 = vadd.xlane.f32.xlu0 %v113
    %v139 = vpop.xlane.xlu0 %138
    %140 = vadd.xlane.f32.xlu0 %v114
    %v141 = vpop.xlane.xlu0 %140
    %142 = vadd.xlane.f32.xlu0 %v115
    %v143 = vpop.xlane.xlu0 %142
    %144 = vadd.xlane.f32.xlu0 %v116
    %v145 = vpop.xlane.xlu0 %144
    %146 = vadd.xlane.f32.xlu0 %v117
    %v147 = vpop.xlane.xlu0 %146
    %148 = vadd.xlane.f32.xlu0 %v118
    %v149 = vpop.xlane.xlu0 %148
    %150 = vadd.xlane.f32.xlu0 %v119
    %v151 = vpop.xlane.xlu0 %150
    %v152 = vmul.f32 %v73, 0.0078125
    %v153 = vmul.f32 %v75, 0.0078125
    %v154 = vmul.f32 %v77, 0.0078125
    %v155 = vmul.f32 %v79, 0.0078125
    %v156 = vmul.f32 %v81, 0.0078125
    %v157 = vmul.f32 %v83, 0.0078125
    %v158 = vmul.f32 %v85, 0.0078125
    %v159 = vmul.f32 %v87, 0.0078125
    %v160 = vmul.f32 %v89, 0.0078125
    %v161 = vmul.f32 %v91, 0.0078125
    %v162 = vmul.f32 %v93, 0.0078125
    %v163 = vmul.f32 %v95, 0.0078125
    %v164 = vmul.f32 %v97, 0.0078125
    %v165 = vmul.f32 %v99, 0.0078125
    %v166 = vmul.f32 %v101, 0.0078125
    %v167 = vmul.f32 %v103, 0.0078125
    %v168 = vmul.f32 %v73, %v152
    %v169 = vmul.f32 %v75, %v153
    %v170 = vmul.f32 %v77, %v154
    %v171 = vmul.f32 %v79, %v155
    %v172 = vmul.f32 %v81, %v156
    %v173 = vmul.f32 %v83, %v157
    %v174 = vmul.f32 %v85, %v158
    %v175 = vmul.f32 %v87, %v159
    %v176 = vmul.f32 %v89, %v160
    %v177 = vmul.f32 %v91, %v161
    %v178 = vmul.f32 %v93, %v162
    %v179 = vmul.f32 %v95, %v163
    %v180 = vmul.f32 %v97, %v164
    %v181 = vmul.f32 %v99, %v165
    %v182 = vmul.f32 %v101, %v166
    %v183 = vmul.f32 %v103, %v167
    %v184 = vsub.f32 %v121, %v168
    %v185 = vsub.f32 %v123, %v169
    %v186 = vsub.f32 %v125, %v170
    %v187 = vsub.f32 %v127, %v171
    %v188 = vsub.f32 %v129, %v172
    %v189 = vsub.f32 %v131, %v173
    %v190 = vsub.f32 %v133, %v174
    %v191 = vsub.f32 %v135, %v175
    %v192 = vsub.f32 %v137, %v176
    %v193 = vsub.f32 %v139, %v177
    %v194 = vsub.f32 %v141, %v178
    %v195 = vsub.f32 %v143, %v179
    %v196 = vsub.f32 %v145, %v180
    %v197 = vsub.f32 %v147, %v181
    %v198 = vsub.f32 %v149, %v182
    %v199 = vsub.f32 %v151, %v183
    %v200 = vmul.f32 %v184, 0.007874016
    %v201 = vmul.f32 %v185, 0.007874016
    %v202 = vmul.f32 %v186, 0.007874016
    %v203 = vmul.f32 %v187, 0.007874016
    %v204 = vmul.f32 %v188, 0.007874016
    %v205 = vmul.f32 %v189, 0.007874016
    %v206 = vmul.f32 %v190, 0.007874016
    %v207 = vmul.f32 %v191, 0.007874016
    %v208 = vmul.f32 %v192, 0.007874016
    %v209 = vmul.f32 %v193, 0.007874016
    %v210 = vmul.f32 %v194, 0.007874016
    %v211 = vmul.f32 %v195, 0.007874016
    %v212 = vmul.f32 %v196, 0.007874016
    %v213 = vmul.f32 %v197, 0.007874016
    %v214 = vmul.f32 %v198, 0.007874016
    %v215 = vmul.f32 %v199, 0.007874016
    %v216 = vmax.f32 %v200, 0.0
    %v217 = vmax.f32 %v201, 0.0
    %v218 = vmax.f32 %v202, 0.0
    %v219 = vmax.f32 %v203, 0.0
    %v220 = vmax.f32 %v204, 0.0
    %v221 = vmax.f32 %v205, 0.0
    %v222 = vmax.f32 %v206, 0.0
    %v223 = vmax.f32 %v207, 0.0
    %v224 = vmax.f32 %v208, 0.0
    %v225 = vmax.f32 %v209, 0.0
    %v226 = vmax.f32 %v210, 0.0
    %v227 = vmax.f32 %v211, 0.0
    %v228 = vmax.f32 %v212, 0.0
    %v229 = vmax.f32 %v213, 0.0
    %v230 = vmax.f32 %v214, 0.0
    %v231 = vmax.f32 %v215, 0.0
    %v232 = vrsqrt.pop %v216
    %v233 = vmul.f32 %v216, %v232
    %vm234 = vcmp.eq.f32.partialorder %v216, inf
    %v235 = vsel %vm234, %v216, %v233
    %vm236 = vcmp.eq.f32.partialorder %v216, 0.0
    %v237 = vand.u32 %v216, 2147483648
    %v238 = vsel %vm236, %v237, %v235
    %v239 = vrsqrt.pop %v217
    %v240 = vmul.f32 %v217, %v239
    %vm241 = vcmp.eq.f32.partialorder %v217, inf
    %v242 = vsel %vm241, %v217, %v240
    %vm243 = vcmp.eq.f32.partialorder %v217, 0.0
    %v244 = vand.u32 %v217, 2147483648
    %v245 = vsel %vm243, %v244, %v242
    %v246 = vrsqrt.pop %v218
    %v247 = vmul.f32 %v218, %v246
    %vm248 = vcmp.eq.f32.partialorder %v218, inf
    %v249 = vsel %vm248, %v218, %v247
    %vm250 = vcmp.eq.f32.partialorder %v218, 0.0
    %v251 = vand.u32 %v218, 2147483648
    %v252 = vsel %vm250, %v251, %v249
    %v253 = vrsqrt.pop %v219
    %v254 = vmul.f32 %v219, %v253
    %vm255 = vcmp.eq.f32.partialorder %v219, inf
    %v256 = vsel %vm255, %v219, %v254
    %vm257 = vcmp.eq.f32.partialorder %v219, 0.0
    %v258 = vand.u32 %v219, 2147483648
    %v259 = vsel %vm257, %v258, %v256
    %v260 = vrsqrt.pop %v220
    %v261 = vmul.f32 %v220, %v260
    %vm262 = vcmp.eq.f32.partialorder %v220, inf
    %v263 = vsel %vm262, %v220, %v261
    %vm264 = vcmp.eq.f32.partialorder %v220, 0.0
    %v265 = vand.u32 %v220, 2147483648
    %v266 = vsel %vm264, %v265, %v263
    %v267 = vrsqrt.pop %v221
    %v268 = vmul.f32 %v221, %v267
    %vm269 = vcmp.eq.f32.partialorder %v221, inf
    %v270 = vsel %vm269, %v221, %v268
    %vm271 = vcmp.eq.f32.partialorder %v221, 0.0
    %v272 = vand.u32 %v221, 2147483648
    %v273 = vsel %vm271, %v272, %v270
    %v274 = vrsqrt.pop %v222
    %v275 = vmul.f32 %v222, %v274
    %vm276 = vcmp.eq.f32.partialorder %v222, inf
    %v277 = vsel %vm276, %v222, %v275
    %vm278 = vcmp.eq.f32.partialorder %v222, 0.0
    %v279 = vand.u32 %v222, 2147483648
    %v280 = vsel %vm278, %v279, %v277
    %v281 = vrsqrt.pop %v223
    %v282 = vmul.f32 %v223, %v281
    %vm283 = vcmp.eq.f32.partialorder %v223, inf
    %v284 = vsel %vm283, %v223, %v282
    %vm285 = vcmp.eq.f32.partialorder %v223, 0.0
    %v286 = vand.u32 %v223, 2147483648
    %v287 = vsel %vm285, %v286, %v284
    %v288 = vrsqrt.pop %v224
    %v289 = vmul.f32 %v224, %v288
    %vm290 = vcmp.eq.f32.partialorder %v224, inf
    %v291 = vsel %vm290, %v224, %v289
    %vm292 = vcmp.eq.f32.partialorder %v224, 0.0
    %v293 = vand.u32 %v224, 2147483648
    %v294 = vsel %vm292, %v293, %v291
    %v295 = vrsqrt.pop %v225
    %v296 = vmul.f32 %v225, %v295
    %vm297 = vcmp.eq.f32.partialorder %v225, inf
    %v298 = vsel %vm297, %v225, %v296
    %vm299 = vcmp.eq.f32.partialorder %v225, 0.0
    %v300 = vand.u32 %v225, 2147483648
    %v301 = vsel %vm299, %v300, %v298
    %v302 = vrsqrt.pop %v226
    %v303 = vmul.f32 %v226, %v302
    %vm304 = vcmp.eq.f32.partialorder %v226, inf
    %v305 = vsel %vm304, %v226, %v303
    %vm306 = vcmp.eq.f32.partialorder %v226, 0.0
    %v307 = vand.u32 %v226, 2147483648
    %v308 = vsel %vm306, %v307, %v305
    %v309 = vrsqrt.pop %v227
    %v310 = vmul.f32 %v227, %v309
    %vm311 = vcmp.eq.f32.partialorder %v227, inf
    %v312 = vsel %vm311, %v227, %v310
    %vm313 = vcmp.eq.f32.partialorder %v227, 0.0
    %v314 = vand.u32 %v227, 2147483648
    %v315 = vsel %vm313, %v314, %v312
    %v316 = vrsqrt.pop %v228
    %v317 = vmul.f32 %v228, %v316
    %vm318 = vcmp.eq.f32.partialorder %v228, inf
    %v319 = vsel %vm318, %v228, %v317
    %vm320 = vcmp.eq.f32.partialorder %v228, 0.0
    %v321 = vand.u32 %v228, 2147483648
    %v322 = vsel %vm320, %v321, %v319
    %v323 = vrsqrt.pop %v229
    %v324 = vmul.f32 %v229, %v323
    %vm325 = vcmp.eq.f32.partialorder %v229, inf
    %v326 = vsel %vm325, %v229, %v324
    %vm327 = vcmp.eq.f32.partialorder %v229, 0.0
    %v328 = vand.u32 %v229, 2147483648
    %v329 = vsel %vm327, %v328, %v326
    %v330 = vrsqrt.pop %v230
    %v331 = vmul.f32 %v230, %v330
    %vm332 = vcmp.eq.f32.partialorder %v230, inf
    %v333 = vsel %vm332, %v230, %v331
    %vm334 = vcmp.eq.f32.partialorder %v230, 0.0
    %v335 = vand.u32 %v230, 2147483648
    %v336 = vsel %vm334, %v335, %v333
    %v337 = vrsqrt.pop %v231
    %v338 = vmul.f32 %v231, %v337
    %vm339 = vcmp.eq.f32.partialorder %v231, inf
    %v340 = vsel %vm339, %v231, %v338
    %vm341 = vcmp.eq.f32.partialorder %v231, 0.0
    %v342 = vand.u32 %v231, 2147483648
    %v343 = vsel %vm341, %v342, %v340
    %v344 = vadd.f32 %v238, 1e-06
    %v345 = vadd.f32 %v245, 1e-06
    %v346 = vadd.f32 %v252, 1e-06
    %v347 = vadd.f32 %v259, 1e-06
    %v348 = vadd.f32 %v266, 1e-06
    %v349 = vadd.f32 %v273, 1e-06
    %v350 = vadd.f32 %v280, 1e-06
    %v351 = vadd.f32 %v287, 1e-06
    %v352 = vadd.f32 %v294, 1e-06
    %v353 = vadd.f32 %v301, 1e-06
    %v354 = vadd.f32 %v308, 1e-06
    %v355 = vadd.f32 %v315, 1e-06
    %v356 = vadd.f32 %v322, 1e-06
    %v357 = vadd.f32 %v329, 1e-06
    %v358 = vadd.f32 %v336, 1e-06
    %v359 = vadd.f32 %v343, 1e-06
    %v360 = vrcp.pop %v344
    %v361 = vrcp.pop %v345
    %v362 = vrcp.pop %v346
    %v363 = vrcp.pop %v347
    %v364 = vrcp.pop %v348
    %v365 = vrcp.pop %v349
    %v366 = vrcp.pop %v350
    %v367 = vrcp.pop %v351
    %v368 = vrcp.pop %v352
    %v369 = vrcp.pop %v353
    %v370 = vrcp.pop %v354
    %v371 = vrcp.pop %v355
    %v372 = vrcp.pop %v356
    %v373 = vrcp.pop %v357
    %v374 = vrcp.pop %v358
    %v375 = vrcp.pop %v359
    %v376 = vsub.f32 %v55, %v152
    %v377 = vsub.f32 %v56, %v153
    %v378 = vsub.f32 %v57, %v154
    %v379 = vsub.f32 %v58, %v155
    %v380 = vsub.f32 %v59, %v156
    %v381 = vsub.f32 %v60, %v157
    %v382 = vsub.f32 %v61, %v158
    %v383 = vsub.f32 %v62, %v159
    %v384 = vsub.f32 %v63, %v160
    %v385 = vsub.f32 %v64, %v161
    %v386 = vsub.f32 %v65, %v162
    %v387 = vsub.f32 %v66, %v163
    %v388 = vsub.f32 %v67, %v164
    %v389 = vsub.f32 %v68, %v165
    %v390 = vsub.f32 %v69, %v166
    %v391 = vsub.f32 %v70, %v167
    %v392 = vlaneseq
    %v393 = vshrl.u32 %v392, 7
    %v394 = vsub.s32 0, %v393
    %v395 = vrot.slane %v71, %v394
    %v396 = vmul.f32 %v395, %v376
    %v397 = vmul.f32 %v395, %v377
    %v398 = vmul.f32 %v395, %v378
    %v399 = vmul.f32 %v395, %v379
    %v400 = vmul.f32 %v395, %v380
    %v401 = vmul.f32 %v395, %v381
    %v402 = vmul.f32 %v395, %v382
    %v403 = vmul.f32 %v395, %v383
    %v404 = vmul.f32 %v395, %v384
    %v405 = vmul.f32 %v395, %v385
    %v406 = vmul.f32 %v395, %v386
    %v407 = vmul.f32 %v395, %v387
    %v408 = vmul.f32 %v395, %v388
    %v409 = vmul.f32 %v395, %v389
    %v410 = vmul.f32 %v395, %v390
    %v411 = vmul.f32 %v395, %v391
    %v412 = vmul.f32 %v396, %v360
    %v413 = vmul.f32 %v397, %v361
    %v414 = vmul.f32 %v398, %v362
    %v415 = vmul.f32 %v399, %v363
    %v416 = vmul.f32 %v400, %v364
    %v417 = vmul.f32 %v401, %v365
    %v418 = vmul.f32 %v402, %v366
    %v419 = vmul.f32 %v403, %v367
    %v420 = vmul.f32 %v404, %v368
    %v421 = vmul.f32 %v405, %v369
    %v422 = vmul.f32 %v406, %v370
    %v423 = vmul.f32 %v407, %v371
    %v424 = vmul.f32 %v408, %v372
    %v425 = vmul.f32 %v409, %v373
    %v426 = vmul.f32 %v410, %v374
    %v427 = vmul.f32 %v411, %v375
    %v428 = vlaneseq
    %v429 = vshrl.u32 %v428, 7
    %v430 = vsub.s32 1, %v429
    %v431 = vrot.slane %v71, %v430
    %v432 = vadd.f32 %v412, %v431
    %v433 = vadd.f32 %v413, %v431
    %v434 = vadd.f32 %v414, %v431
    %v435 = vadd.f32 %v415, %v431
    %v436 = vadd.f32 %v416, %v431
    %v437 = vadd.f32 %v417, %v431
    %v438 = vadd.f32 %v418, %v431
    %v439 = vadd.f32 %v419, %v431
    %v440 = vadd.f32 %v420, %v431
    %v441 = vadd.f32 %v421, %v431
    %v442 = vadd.f32 %v422, %v431
    %v443 = vadd.f32 %v423, %v431
    %v444 = vadd.f32 %v424, %v431
    %v445 = vadd.f32 %v425, %v431
    %v446 = vadd.f32 %v426, %v431
    %v447 = vadd.f32 %v427, %v431
    %v448 = vpack.c.bf16 %v433, %v432
    %v449 = vpack.c.bf16 %v435, %v434
    %v450 = vpack.c.bf16 %v437, %v436
    %v451 = vpack.c.bf16 %v439, %v438
    %v452 = vpack.c.bf16 %v441, %v440
    %v453 = vpack.c.bf16 %v443, %v442
    %v454 = vpack.c.bf16 %v445, %v444
    %v455 = vpack.c.bf16 %v447, %v446
    %v456 = vld [vmem:[#allocation7] sm:$0xf]
    %v457 = vld [vmem:[#allocation7 + $0x4] sm:$0xf]
    %v458 = vld [vmem:[#allocation7 + $0x8] sm:$0xf]
    %v459 = vld [vmem:[#allocation7 + $0xc] sm:$0xf]
    %v460 = vld [vmem:[#allocation7 + $0x10] sm:$0xf]
    %v461 = vld [vmem:[#allocation7 + $0x14] sm:$0xf]
    %v462 = vld [vmem:[#allocation7 + $0x18] sm:$0xf]
    %v463 = vld [vmem:[#allocation7 + $0x1c] sm:$0xf]
    %v464 = vld [vmem:[#allocation7 + $0x20] sm:$0xf]
    %v465 = vld [vmem:[#allocation7 + $0x24] sm:$0xf]
    %v466 = vld [vmem:[#allocation7 + $0x28] sm:$0xf]
    %v467 = vld [vmem:[#allocation7 + $0x2c] sm:$0xf]
    %v468 = vld [vmem:[#allocation7 + $0x30] sm:$0xf]
    %v469 = vld [vmem:[#allocation7 + $0x34] sm:$0xf]
    %v470 = vld [vmem:[#allocation7 + $0x38] sm:$0xf]
    %v471 = vld [vmem:[#allocation7 + $0x3c] sm:$0xf]
    %v488 = vunpack.c.l.b16 %v456
    %v489 = vunpack.c.l.b16 %v457
    %v490 = vunpack.c.l.b16 %v458
    %v491 = vunpack.c.l.b16 %v459
    %v492 = vunpack.c.l.b16 %v460
    %v493 = vunpack.c.l.b16 %v461
    %v494 = vunpack.c.l.b16 %v462
    %v495 = vunpack.c.l.b16 %v463
    %v496 = vunpack.c.l.b16 %v464
    %v497 = vunpack.c.l.b16 %v465
    %v498 = vunpack.c.l.b16 %v466
    %v499 = vunpack.c.l.b16 %v467
    %v500 = vunpack.c.l.b16 %v468
    %v501 = vunpack.c.l.b16 %v469
    %v502 = vunpack.c.l.b16 %v470
    %v503 = vunpack.c.l.b16 %v471
    %v504 = vpack.c.b16 %v489, %v488
    %v505 = vpack.c.b16 %v491, %v490
    %v506 = vpack.c.b16 %v493, %v492
    %v507 = vpack.c.b16 %v495, %v494
    %v508 = vpack.c.b16 %v497, %v496
    %v509 = vpack.c.b16 %v499, %v498
    %v510 = vpack.c.b16 %v501, %v500
    %v511 = vpack.c.b16 %v503, %v502
    %520 = vmatprep.subr.bf16.mxu0 0
    %521 = vmatpush1.bf16.msra.mxu0 %v511
    %522 = vmatprep.subr.bf16.mxu0 0
    %523 = vmatpush1.bf16.msra.mxu0 %v510
    %524 = vmatprep.subr.bf16.mxu0 0
    %525 = vmatpush1.bf16.msra.mxu0 %v509
    %526 = vmatprep.subr.bf16.mxu0 0
    %527 = vmatpush1.bf16.msra.mxu0 %v508
    %528 = vmatprep.subr.bf16.mxu0 0
    %529 = vmatpush1.bf16.msra.mxu0 %v507
    %530 = vmatprep.subr.bf16.mxu0 0
    %531 = vmatpush1.bf16.msra.mxu0 %v506
    %532 = vmatprep.subr.bf16.mxu0 0
    %533 = vmatpush1.bf16.msra.mxu0 %v505
    %534 = vmatprep.subr.bf16.mxu0 0
    %535 = vmatpush1.bf16.msra.mxu0 %v504
    %536 = vmatprep.subr.bf16.mxu0 0
    %537 = vmatpush2.bf16.msra.mxu0 0
    %538 = vmatprep.subr.bf16.mxu0 0
    %539 = vmatpush2.bf16.msra.mxu0 0
    %540 = vmatprep.subr.bf16.mxu0 0
    %541 = vmatpush2.bf16.msra.mxu0 0
    %542 = vmatprep.subr.bf16.mxu0 0
    %543 = vmatpush2.bf16.msra.mxu0 0
    %544 = vmatprep.subr.bf16.mxu0 0
    %545 = vmatpush2.bf16.msra.mxu0 0
    %546 = vmatprep.subr.bf16.mxu0 0
    %547 = vmatpush2.bf16.msra.mxu0 0
    %548 = vmatprep.subr.bf16.mxu0 0
    %549 = vmatpush2.bf16.msra.mxu0 0
    %550 = vmatprep.subr.bf16.mxu0 0
    %551 = vmatpush2.bf16.msra.mxu0 0
    %552 = vmatprep.mubr.bf16.mxu0 0
    %553 = vmatmul.mubr.bf16.gmra.mxu0 %v448
    %v554 = vpop.f32.mrf.mxu0
    %v555 = vadd.f32 0.0, %v554
    %v556 = vpop.f32.mrf.mxu0
    %v557 = vpop.f32.mrf.mxu0
    %v558 = vadd.f32 0.0, %v557
    %v559 = vpop.f32.mrf.mxu0
    %560 = vmatprep.mubr.bf16.mxu0 0
    %561 = vmatmul.mubr.bf16.gmra.mxu0 %v449
    %v562 = vpop.f32.mrf.mxu0
    %v563 = vadd.f32 0.0, %v562
    %v564 = vpop.f32.mrf.mxu0
    %v565 = vpop.f32.mrf.mxu0
    %v566 = vadd.f32 0.0, %v565
    %v567 = vpop.f32.mrf.mxu0
    %568 = vmatprep.mubr.bf16.mxu0 0
    %569 = vmatmul.mubr.bf16.gmra.mxu0 %v450
    %v570 = vpop.f32.mrf.mxu0
    %v571 = vadd.f32 0.0, %v570
    %v572 = vpop.f32.mrf.mxu0
    %v573 = vpop.f32.mrf.mxu0
    %v574 = vadd.f32 0.0, %v573
    %v575 = vpop.f32.mrf.mxu0
    %576 = vmatprep.mubr.bf16.mxu0 0
    %577 = vmatmul.mubr.bf16.gmra.mxu0 %v451
    %v578 = vpop.f32.mrf.mxu0
    %v579 = vadd.f32 0.0, %v578
    %v580 = vpop.f32.mrf.mxu0
    %v581 = vpop.f32.mrf.mxu0
    %v582 = vadd.f32 0.0, %v581
    %v583 = vpop.f32.mrf.mxu0
    %584 = vmatprep.mubr.bf16.mxu0 0
    %585 = vmatmul.mubr.bf16.gmra.mxu0 %v452
    %v586 = vpop.f32.mrf.mxu0
    %v587 = vadd.f32 0.0, %v586
    %v588 = vpop.f32.mrf.mxu0
    %v589 = vpop.f32.mrf.mxu0
    %v590 = vadd.f32 0.0, %v589
    %v591 = vpop.f32.mrf.mxu0
    %592 = vmatprep.mubr.bf16.mxu0 0
    %593 = vmatmul.mubr.bf16.gmra.mxu0 %v453
    %v594 = vpop.f32.mrf.mxu0
    %v595 = vadd.f32 0.0, %v594
    %v596 = vpop.f32.mrf.mxu0
    %v597 = vpop.f32.mrf.mxu0
    %v598 = vadd.f32 0.0, %v597
    %v599 = vpop.f32.mrf.mxu0
    %600 = vmatprep.mubr.bf16.mxu0 0
    %601 = vmatmul.mubr.bf16.gmra.mxu0 %v454
    %v602 = vpop.f32.mrf.mxu0
    %v603 = vadd.f32 0.0, %v602
    %v604 = vpop.f32.mrf.mxu0
    %v605 = vpop.f32.mrf.mxu0
    %v606 = vadd.f32 0.0, %v605
    %v607 = vpop.f32.mrf.mxu0
    %608 = vmatprep.mubr.bf16.mxu0 0
    %609 = vmatmul.mubr.bf16.gmra.mxu0 %v455
    %v610 = vpop.f32.mrf.mxu0
    %v611 = vadd.f32 0.0, %v610
    %v612 = vpop.f32.mrf.mxu0
    %v613 = vpop.f32.mrf.mxu0
    %v614 = vadd.f32 0.0, %v613
    %v615 = vpop.f32.mrf.mxu0
    %616 = vdwg.mxu0
    %v617 = vadd.f32 %v55, %v555
    %v618 = vadd.f32 %v56, %v558
    %v619 = vadd.f32 %v57, %v563
    %v620 = vadd.f32 %v58, %v566
    %v621 = vadd.f32 %v59, %v571
    %v622 = vadd.f32 %v60, %v574
    %v623 = vadd.f32 %v61, %v579
    %v624 = vadd.f32 %v62, %v582
    %v625 = vadd.f32 %v63, %v587
    %v626 = vadd.f32 %v64, %v590
    %v627 = vadd.f32 %v65, %v595
    %v628 = vadd.f32 %v66, %v598
    %v629 = vadd.f32 %v67, %v603
    %v630 = vadd.f32 %v68, %v606
    %v631 = vadd.f32 %v69, %v611
    %v632 = vadd.f32 %v70, %v614
    %v633 = vlaneseq
    %v634 = vshrl.u32 %v633, 7
    %v635 = vsub.s32 2, %v634
    %v636 = vrot.slane %v71, %v635
    %v637 = vadd.f32 %v617, %v636
    %v638 = vadd.f32 %v618, %v636
    %v639 = vadd.f32 %v619, %v636
    %v640 = vadd.f32 %v620, %v636
    %v641 = vadd.f32 %v621, %v636
    %v642 = vadd.f32 %v622, %v636
    %v643 = vadd.f32 %v623, %v636
    %v644 = vadd.f32 %v624, %v636
    %v645 = vadd.f32 %v625, %v636
    %v646 = vadd.f32 %v626, %v636
    %v647 = vadd.f32 %v627, %v636
    %v648 = vadd.f32 %v628, %v636
    %v649 = vadd.f32 %v629, %v636
    %v650 = vadd.f32 %v630, %v636
    %v651 = vadd.f32 %v631, %v636
    %v652 = vadd.f32 %v632, %v636
    %653 = vst [vmem:[#allocation8] sm:$0xff] %v637
    %654 = vst [vmem:[#allocation8 + $0x8] sm:$0xff] %v638
    %655 = vst [vmem:[#allocation8 + $0x10] sm:$0xff] %v639
    %656 = vst [vmem:[#allocation8 + $0x18] sm:$0xff] %v640
    %657 = vst [vmem:[#allocation8 + $0x20] sm:$0xff] %v641
    %658 = vst [vmem:[#allocation8 + $0x28] sm:$0xff] %v642
    %659 = vst [vmem:[#allocation8 + $0x30] sm:$0xff] %v643
    %660 = vst [vmem:[#allocation8 + $0x38] sm:$0xff] %v644
    %661 = vst [vmem:[#allocation8 + $0x40] sm:$0xff] %v645
    %662 = vst [vmem:[#allocation8 + $0x48] sm:$0xff] %v646
    %663 = vst [vmem:[#allocation8 + $0x50] sm:$0xff] %v647
    %664 = vst [vmem:[#allocation8 + $0x58] sm:$0xff] %v648
    %665 = vst [vmem:[#allocation8 + $0x60] sm:$0xff] %v649
    %666 = vst [vmem:[#allocation8 + $0x68] sm:$0xff] %v650
    %667 = vst [vmem:[#allocation8 + $0x70] sm:$0xff] %v651
    %668 = vst [vmem:[#allocation8 + $0x78] sm:$0xff] %v652
    // Predicated region
    $region26: #{tpu_custom_call.1} parent=1 // pred_check
      _
    $region27: #{tpu_custom_call.1} parent=1 // pred_check_branch
      %670 = sbr.rel (0) target = $region29
    $region28: #{tpu_custom_call.1} parent=1 // pred_region
      %s672 = ssub.s32 2048, 2048
      %673 = vsyncadd [#allocation4], %s672
      %s674 = sshll.u32 [#allocation8], 4
      %s675 = int_to_ptr.vmem [resolvable:$true] %s674
      %680 = dma.vmem_to_hbm [thread:$0]  %s675, 2048, %s3, [#allocation4], 128, 128, 8
    $region29: #{tpu_custom_call.1} parent=1 // pred_fallthru
      _
    // Predicated region
    $region30: #{tpu_custom_call.1} parent=1 // pred_check
      _
    $region31: #{tpu_custom_call.1} parent=1 // pred_check_branch
      %682 = sbr.rel (0) target = $region33
    $region32: #{tpu_custom_call.1} parent=1 // pred_region
      %683 = dma.done [#allocation4], 2048
    $region33: #{tpu_custom_call.1} parent=1 // pred_fallthru
      _
    %684 = vsyncpa [#allocation3], 1
    %685 = vsyncpa [#allocation6], 1
    %686 = vsyncpa [#allocation4], 1

</llo_original>
